<compile_context>
chip_gen: v6e
topology: v6e:2x2x1
jax: 0.10.0
libtpu: 0.0.40
codegen_flags: <defaults>
</compile_context>

<pallas_src>
import jax
import jax.numpy as jnp
from jax.experimental import pallas as pl
from jax.experimental.pallas import tpu as pltpu


def _encoder_kernel(xemb_ref, wih_ref, whh_ref, b_ref, h0_ref, c0_ref,
                    whead_ref, bhead_ref, out_ref):
    S = xemb_ref.shape[0]
    L = h0_ref.shape[1]

    # Hoisted input projection: one batched matmul covering every timestep.
    #   xp[t] = x_t @ W_ih^T + (b_ih + b_hh)
    xp = jnp.dot(xemb_ref[...], wih_ref[...],
                 preferred_element_type=jnp.float32) + b_ref[...]          # (S, 4L)

    whh = whh_ref[...]                                                     # (L, 4L)
    h = h0_ref[...]                                                        # (1, L)
    c = c0_ref[...]                                                        # (1, L)

    # LSTM recurrence is inherently sequential; S is static and tiny, so fully
    # unroll it (static Python loop -> every slice index is static).
    for t in range(S):
        gates = xp[t:t + 1, :] + jnp.dot(h, whh,
                                         preferred_element_type=jnp.float32)  # (1, 4L)
        sig = jax.nn.sigmoid(gates)      # one EUP pass, i|f|o sliced from it
        tah = jnp.tanh(gates)            # one EUP pass, g sliced from it
        i = sig[:, 0 * L:1 * L]
        f = sig[:, 1 * L:2 * L]
        g = tah[:, 2 * L:3 * L]
        o = sig[:, 3 * L:4 * L]
        c = f * c + i * g
        h = o * jnp.tanh(c)

    # Fused heads: [means | log_vars] (lane-padded) in one MXU pass + one store.
    out_ref[...] = jnp.dot(h, whead_ref[...],
                           preferred_element_type=jnp.float32) + bhead_ref[...]


def init_params(key, input_size, latent_size, linear_size):
    ks = jax.random.split(key, 8)
    s = 0.1
    emb = jax.random.normal(ks[0], (input_size, latent_size), jnp.float32) * s
    w_ih = jax.random.normal(ks[1], (4 * latent_size, latent_size), jnp.float32) * s  # torch layout (4L, L)
    w_hh = jax.random.normal(ks[2], (4 * latent_size, latent_size), jnp.float32) * s
    b_ih = jax.random.normal(ks[3], (4 * latent_size,), jnp.float32) * s
    b_hh = jax.random.normal(ks[4], (4 * latent_size,), jnp.float32) * s
    w_m = jax.random.normal(ks[5], (linear_size, latent_size), jnp.float32) * s       # torch layout (out, in)
    b_m = jax.random.normal(ks[6], (linear_size,), jnp.float32) * s
    w_v = jax.random.normal(ks[7], (linear_size, latent_size), jnp.float32) * s
    b_v = jnp.zeros((linear_size,), jnp.float32)

    # Fused + lane-padded head weights (means | log_vars) for a single matmul
    # and an unmasked 128-lane store inside the kernel.
    whead = jnp.concatenate([w_m.T, w_v.T], axis=1)                # (L, 2*linear_size)
    bhead = jnp.concatenate([b_m, b_v]).reshape(1, -1)             # (1, 2*linear_size)
    pad = (-whead.shape[1]) % 128
    if pad:
        whead = jnp.pad(whead, ((0, 0), (0, pad)))
        bhead = jnp.pad(bhead, ((0, 0), (0, pad)))

    return {
        "emb": emb,
        "wih_t": w_ih.T,                        # (L, 4L)
        "whh_t": w_hh.T,                        # (L, 4L)
        "bias": (b_ih + b_hh).reshape(1, -1),   # (1, 4L)
        "wm": w_m.T, "bm": b_m.reshape(1, -1),  # kept for the pure-JAX reference
        "wv": w_v.T, "bv": b_v.reshape(1, -1),
        "whead": whead, "bhead": bhead,
    }


def encoder_forward(params, x, c1, condition_size):
    emb = params["emb"]
    L = emb.shape[1]
    linear_size = params["bm"].shape[1]

    # Embedding gather off the serial critical path; clamp ids so no
    # out-of-vocab index can ever turn into a silent OOB VMEM read.
    ids = jnp.clip(x.astype(jnp.int32), 0, emb.shape[0] - 1)
    x_emb = jnp.take(emb, ids, axis=0)                              # (S, L)

    # PyTorch forward glue: h0 = zeros(1,1,L-cond); hidden = cat((h0, c1), -1); cell = zeros_like(hidden)
    cond = c1.reshape(1, -1).astype(jnp.float32)
    h0 = jnp.concatenate([jnp.zeros((1, L - condition_size), jnp.float32), cond], axis=-1)
    c0 = jnp.zeros_like(h0)

    vmem = pl.BlockSpec(memory_space=pltpu.MemorySpace.VMEM)
    out_pad = params["whead"].shape[1]                              # 128-padded lane width

    out = pl.pallas_call(
        _encoder_kernel,
        out_shape=jax.ShapeDtypeStruct((1, out_pad), jnp.float32),
        in_specs=[vmem] * 8,
        out_specs=vmem,
    )(x_emb, params["wih_t"], params["whh_t"], params["bias"], h0, c0,
      params["whead"], params["bhead"])

    # Slice padded slab back into PyTorch-shaped outputs (1, 1, linear_size).
    means = out[:, :linear_size].reshape(1, 1, linear_size)
    log_vars = out[:, linear_size:2 * linear_size].reshape(1, 1, linear_size)
    return means, log_vars
    # TODO(synk): if many sequences exist, add a batch grid axis (B multiple of 8,
    # dimension_semantics=("parallel",)) so the per-step matmul actually fills the MXU.


def encoder_reference(params, x, c1, latent_size, condition_size):
    """Pure-JAX reference mirroring the PyTorch forward (for correctness check)."""
    L = latent_size
    emb = params["emb"][x]                                          # (S, L)
    h = jnp.concatenate([jnp.zeros((1, L - condition_size), jnp.float32),
                         c1.reshape(1, -1)], axis=-1)
    c = jnp.zeros_like(h)
    wih, whh, b = params["wih_t"], params["whh_t"], params["bias"]
    for t in range(emb.shape[0]):
        gates = emb[t:t + 1] @ wih + h @ whh + b
        i = jax.nn.sigmoid(gates[:, :L])
        f = jax.nn.sigmoid(gates[:, L:2 * L])
        g = jnp.tanh(gates[:, 2 * L:3 * L])
        o = jax.nn.sigmoid(gates[:, 3 * L:])
        c = f * c + i * g
        h = o * jnp.tanh(c)
    means = h @ params["wm"] + params["bm"]
    log_vars = h @ params["wv"] + params["bv"]
    return means.reshape(1, 1, -1), log_vars.reshape(1, 1, -1)


if __name__ == "__main__":
    input_size = 50        # vocab size
    latent_size = 32       # LSTM hidden / embedding dim
    condition_size = 8
    linear_size = 16
    seq_len = 8

    key = jax.random.PRNGKey(0)
    kp, kx, kc = jax.random.split(key, 3)
    params = init_params(kp, input_size, latent_size, linear_size)
    x = jax.random.randint(kx, (seq_len,), 0, input_size, dtype=jnp.int32)   # token ids
    c1 = jax.random.normal(kc, (condition_size,), jnp.float32)               # condition vector

    means, log_vars = encoder_forward(params, x, c1, condition_size)
    jax.block_until_ready((means, log_vars))

    m_ref, lv_ref = encoder_reference(params, x, c1, latent_size, condition_size)
    assert means.shape == (1, 1, linear_size) and log_vars.shape == (1, 1, linear_size)
    assert jnp.allclose(means, m_ref, rtol=1e-4, atol=1e-5), "means mismatch vs reference"
    assert jnp.allclose(log_vars, lv_ref, rtol=1e-4, atol=1e-5), "log_vars mismatch vs reference"

    print("KERNEL_OK")
</pallas_src>

<mosaic_0001>
module attributes {stable_mosaic.version = 11 : i64} {
  func.func @_encoder_kernel(%arg0: memref<8x32xf32, #tpu.memory_space<vmem>>, %arg1: memref<32x128xf32, #tpu.memory_space<vmem>>, %arg2: memref<32x128xf32, #tpu.memory_space<vmem>>, %arg3: memref<1x128xf32, #tpu.memory_space<vmem>>, %arg4: memref<1x32xf32, #tpu.memory_space<vmem>>, %arg5: memref<1x32xf32, #tpu.memory_space<vmem>>, %arg6: memref<32x128xf32, #tpu.memory_space<vmem>>, %arg7: memref<1x128xf32, #tpu.memory_space<vmem>>, %arg8: memref<1x128xf32, #tpu.memory_space<vmem>>) attributes {dimension_semantics = [], scalar_prefetch = 0 : i64, scratch_operands = 0 : i64, tpu.core_type = #tpu.core_type<tc>} {
    %c0 = arith.constant 0 : index
    %c0_0 = arith.constant 0 : index
    %0 = vector.load %arg0[%c0, %c0_0] : memref<8x32xf32, #tpu.memory_space<vmem>>, vector<8x32xf32>
    %c0_1 = arith.constant 0 : index
    %c0_2 = arith.constant 0 : index
    %1 = vector.load %arg1[%c0_1, %c0_2] : memref<32x128xf32, #tpu.memory_space<vmem>>, vector<32x128xf32>
    %cst = arith.constant dense<0.000000e+00> : vector<8x128xf32>
    %2 = tpu.matmul %0, %1, %cst {dimension_numbers = #tpu.dot_dimension_numbers<[1], [0], [0], [1], [0, 0, 1, 1], [], []>} : vector<8x32xf32>, vector<32x128xf32>, vector<8x128xf32> -> vector<8x128xf32>
    %c0_3 = arith.constant 0 : index
    %c0_4 = arith.constant 0 : index
    %3 = vector.load %arg3[%c0_3, %c0_4] : memref<1x128xf32, #tpu.memory_space<vmem>>, vector<1x128xf32>
    %4 = vector.broadcast %3 : vector<1x128xf32> to vector<8x128xf32>
    %5 = arith.addf %2, %4 : vector<8x128xf32>
    %c0_5 = arith.constant 0 : index
    %c0_6 = arith.constant 0 : index
    %6 = vector.load %arg2[%c0_5, %c0_6] : memref<32x128xf32, #tpu.memory_space<vmem>>, vector<32x128xf32>
    %c0_7 = arith.constant 0 : index
    %c0_8 = arith.constant 0 : index
    %7 = vector.load %arg4[%c0_7, %c0_8] : memref<1x32xf32, #tpu.memory_space<vmem>>, vector<1x32xf32>
    %c0_9 = arith.constant 0 : index
    %c0_10 = arith.constant 0 : index
    %8 = vector.load %arg5[%c0_9, %c0_10] : memref<1x32xf32, #tpu.memory_space<vmem>>, vector<1x32xf32>
    %9 = vector.extract_strided_slice %5 {offsets = [0, 0], sizes = [1, 128], strides = [1, 1]} : vector<8x128xf32> to vector<1x128xf32>
    %cst_11 = arith.constant dense<0.000000e+00> : vector<1x128xf32>
    %10 = tpu.matmul %7, %6, %cst_11 {dimension_numbers = #tpu.dot_dimension_numbers<[1], [0], [0], [1], [0, 0, 1, 1], [], []>} : vector<1x32xf32>, vector<32x128xf32>, vector<1x128xf32> -> vector<1x128xf32>
    %11 = arith.addf %9, %10 : vector<1x128xf32>
    %12 = arith.negf %11 : vector<1x128xf32>
    %13 = math.exp %12 : vector<1x128xf32>
    %cst_12 = arith.constant 1.000000e+00 : f32
    %14 = vector.broadcast %cst_12 : f32 to vector<1x128xf32>
    %15 = arith.addf %14, %13 : vector<1x128xf32>
    %16 = arith.divf %14, %15 : vector<1x128xf32>
    %17 = math.tanh %11 : vector<1x128xf32>
    %18 = vector.extract_strided_slice %16 {offsets = [0, 0], sizes = [1, 32], strides = [1, 1]} : vector<1x128xf32> to vector<1x32xf32>
    %19 = vector.extract_strided_slice %16 {offsets = [0, 32], sizes = [1, 32], strides = [1, 1]} : vector<1x128xf32> to vector<1x32xf32>
    %20 = vector.extract_strided_slice %17 {offsets = [0, 64], sizes = [1, 32], strides = [1, 1]} : vector<1x128xf32> to vector<1x32xf32>
    %21 = vector.extract_strided_slice %16 {offsets = [0, 96], sizes = [1, 32], strides = [1, 1]} : vector<1x128xf32> to vector<1x32xf32>
    %22 = arith.mulf %19, %8 : vector<1x32xf32>
    %23 = arith.mulf %18, %20 : vector<1x32xf32>
    %24 = arith.addf %22, %23 : vector<1x32xf32>
    %25 = math.tanh %24 : vector<1x32xf32>
    %26 = arith.mulf %21, %25 : vector<1x32xf32>
    %27 = vector.extract_strided_slice %5 {offsets = [1, 0], sizes = [1, 128], strides = [1, 1]} : vector<8x128xf32> to vector<1x128xf32>
    %cst_13 = arith.constant dense<0.000000e+00> : vector<1x128xf32>
    %28 = tpu.matmul %26, %6, %cst_13 {dimension_numbers = #tpu.dot_dimension_numbers<[1], [0], [0], [1], [0, 0, 1, 1], [], []>} : vector<1x32xf32>, vector<32x128xf32>, vector<1x128xf32> -> vector<1x128xf32>
    %29 = arith.addf %27, %28 : vector<1x128xf32>
    %30 = arith.negf %29 : vector<1x128xf32>
    %31 = math.exp %30 : vector<1x128xf32>
    %cst_14 = arith.constant 1.000000e+00 : f32
    %32 = vector.broadcast %cst_14 : f32 to vector<1x128xf32>
    %33 = arith.addf %32, %31 : vector<1x128xf32>
    %34 = arith.divf %32, %33 : vector<1x128xf32>
    %35 = math.tanh %29 : vector<1x128xf32>
    %36 = vector.extract_strided_slice %34 {offsets = [0, 0], sizes = [1, 32], strides = [1, 1]} : vector<1x128xf32> to vector<1x32xf32>
    %37 = vector.extract_strided_slice %34 {offsets = [0, 32], sizes = [1, 32], strides = [1, 1]} : vector<1x128xf32> to vector<1x32xf32>
    %38 = vector.extract_strided_slice %35 {offsets = [0, 64], sizes = [1, 32], strides = [1, 1]} : vector<1x128xf32> to vector<1x32xf32>
    %39 = vector.extract_strided_slice %34 {offsets = [0, 96], sizes = [1, 32], strides = [1, 1]} : vector<1x128xf32> to vector<1x32xf32>
    %40 = arith.mulf %37, %24 : vector<1x32xf32>
    %41 = arith.mulf %36, %38 : vector<1x32xf32>
    %42 = arith.addf %40, %41 : vector<1x32xf32>
    %43 = math.tanh %42 : vector<1x32xf32>
    %44 = arith.mulf %39, %43 : vector<1x32xf32>
    %45 = vector.extract_strided_slice %5 {offsets = [2, 0], sizes = [1, 128], strides = [1, 1]} : vector<8x128xf32> to vector<1x128xf32>
    %cst_15 = arith.constant dense<0.000000e+00> : vector<1x128xf32>
    %46 = tpu.matmul %44, %6, %cst_15 {dimension_numbers = #tpu.dot_dimension_numbers<[1], [0], [0], [1], [0, 0, 1, 1], [], []>} : vector<1x32xf32>, vector<32x128xf32>, vector<1x128xf32> -> vector<1x128xf32>
    %47 = arith.addf %45, %46 : vector<1x128xf32>
    %48 = arith.negf %47 : vector<1x128xf32>
    %49 = math.exp %48 : vector<1x128xf32>
    %cst_16 = arith.constant 1.000000e+00 : f32
    %50 = vector.broadcast %cst_16 : f32 to vector<1x128xf32>
    %51 = arith.addf %50, %49 : vector<1x128xf32>
    %52 = arith.divf %50, %51 : vector<1x128xf32>
    %53 = math.tanh %47 : vector<1x128xf32>
    %54 = vector.extract_strided_slice %52 {offsets = [0, 0], sizes = [1, 32], strides = [1, 1]} : vector<1x128xf32> to vector<1x32xf32>
    %55 = vector.extract_strided_slice %52 {offsets = [0, 32], sizes = [1, 32], strides = [1, 1]} : vector<1x128xf32> to vector<1x32xf32>
    %56 = vector.extract_strided_slice %53 {offsets = [0, 64], sizes = [1, 32], strides = [1, 1]} : vector<1x128xf32> to vector<1x32xf32>
    %57 = vector.extract_strided_slice %52 {offsets = [0, 96], sizes = [1, 32], strides = [1, 1]} : vector<1x128xf32> to vector<1x32xf32>
    %58 = arith.mulf %55, %42 : vector<1x32xf32>
    %59 = arith.mulf %54, %56 : vector<1x32xf32>
    %60 = arith.addf %58, %59 : vector<1x32xf32>
    %61 = math.tanh %60 : vector<1x32xf32>
    %62 = arith.mulf %57, %61 : vector<1x32xf32>
    %63 = vector.extract_strided_slice %5 {offsets = [3, 0], sizes = [1, 128], strides = [1, 1]} : vector<8x128xf32> to vector<1x128xf32>
    %cst_17 = arith.constant dense<0.000000e+00> : vector<1x128xf32>
    %64 = tpu.matmul %62, %6, %cst_17 {dimension_numbers = #tpu.dot_dimension_numbers<[1], [0], [0], [1], [0, 0, 1, 1], [], []>} : vector<1x32xf32>, vector<32x128xf32>, vector<1x128xf32> -> vector<1x128xf32>
    %65 = arith.addf %63, %64 : vector<1x128xf32>
    %66 = arith.negf %65 : vector<1x128xf32>
    %67 = math.exp %66 : vector<1x128xf32>
    %cst_18 = arith.constant 1.000000e+00 : f32
    %68 = vector.broadcast %cst_18 : f32 to vector<1x128xf32>
    %69 = arith.addf %68, %67 : vector<1x128xf32>
    %70 = arith.divf %68, %69 : vector<1x128xf32>
    %71 = math.tanh %65 : vector<1x128xf32>
    %72 = vector.extract_strided_slice %70 {offsets = [0, 0], sizes = [1, 32], strides = [1, 1]} : vector<1x128xf32> to vector<1x32xf32>
    %73 = vector.extract_strided_slice %70 {offsets = [0, 32], sizes = [1, 32], strides = [1, 1]} : vector<1x128xf32> to vector<1x32xf32>
    %74 = vector.extract_strided_slice %71 {offsets = [0, 64], sizes = [1, 32], strides = [1, 1]} : vector<1x128xf32> to vector<1x32xf32>
    %75 = vector.extract_strided_slice %70 {offsets = [0, 96], sizes = [1, 32], strides = [1, 1]} : vector<1x128xf32> to vector<1x32xf32>
    %76 = arith.mulf %73, %60 : vector<1x32xf32>
    %77 = arith.mulf %72, %74 : vector<1x32xf32>
    %78 = arith.addf %76, %77 : vector<1x32xf32>
    %79 = math.tanh %78 : vector<1x32xf32>
    %80 = arith.mulf %75, %79 : vector<1x32xf32>
    %81 = vector.extract_strided_slice %5 {offsets = [4, 0], sizes = [1, 128], strides = [1, 1]} : vector<8x128xf32> to vector<1x128xf32>
    %cst_19 = arith.constant dense<0.000000e+00> : vector<1x128xf32>
    %82 = tpu.matmul %80, %6, %cst_19 {dimension_numbers = #tpu.dot_dimension_numbers<[1], [0], [0], [1], [0, 0, 1, 1], [], []>} : vector<1x32xf32>, vector<32x128xf32>, vector<1x128xf32> -> vector<1x128xf32>
    %83 = arith.addf %81, %82 : vector<1x128xf32>
    %84 = arith.negf %83 : vector<1x128xf32>
    %85 = math.exp %84 : vector<1x128xf32>
    %cst_20 = arith.constant 1.000000e+00 : f32
    %86 = vector.broadcast %cst_20 : f32 to vector<1x128xf32>
    %87 = arith.addf %86, %85 : vector<1x128xf32>
    %88 = arith.divf %86, %87 : vector<1x128xf32>
    %89 = math.tanh %83 : vector<1x128xf32>
    %90 = vector.extract_strided_slice %88 {offsets = [0, 0], sizes = [1, 32], strides = [1, 1]} : vector<1x128xf32> to vector<1x32xf32>
    %91 = vector.extract_strided_slice %88 {offsets = [0, 32], sizes = [1, 32], strides = [1, 1]} : vector<1x128xf32> to vector<1x32xf32>
    %92 = vector.extract_strided_slice %89 {offsets = [0, 64], sizes = [1, 32], strides = [1, 1]} : vector<1x128xf32> to vector<1x32xf32>
    %93 = vector.extract_strided_slice %88 {offsets = [0, 96], sizes = [1, 32], strides = [1, 1]} : vector<1x128xf32> to vector<1x32xf32>
    %94 = arith.mulf %91, %78 : vector<1x32xf32>
    %95 = arith.mulf %90, %92 : vector<1x32xf32>
    %96 = arith.addf %94, %95 : vector<1x32xf32>
    %97 = math.tanh %96 : vector<1x32xf32>
    %98 = arith.mulf %93, %97 : vector<1x32xf32>
    %99 = vector.extract_strided_slice %5 {offsets = [5, 0], sizes = [1, 128], strides = [1, 1]} : vector<8x128xf32> to vector<1x128xf32>
    %cst_21 = arith.constant dense<0.000000e+00> : vector<1x128xf32>
    %100 = tpu.matmul %98, %6, %cst_21 {dimension_numbers = #tpu.dot_dimension_numbers<[1], [0], [0], [1], [0, 0, 1, 1], [], []>} : vector<1x32xf32>, vector<32x128xf32>, vector<1x128xf32> -> vector<1x128xf32>
    %101 = arith.addf %99, %100 : vector<1x128xf32>
    %102 = arith.negf %101 : vector<1x128xf32>
    %103 = math.exp %102 : vector<1x128xf32>
    %cst_22 = arith.constant 1.000000e+00 : f32
    %104 = vector.broadcast %cst_22 : f32 to vector<1x128xf32>
    %105 = arith.addf %104, %103 : vector<1x128xf32>
    %106 = arith.divf %104, %105 : vector<1x128xf32>
    %107 = math.tanh %101 : vector<1x128xf32>
    %108 = vector.extract_strided_slice %106 {offsets = [0, 0], sizes = [1, 32], strides = [1, 1]} : vector<1x128xf32> to vector<1x32xf32>
    %109 = vector.extract_strided_slice %106 {offsets = [0, 32], sizes = [1, 32], strides = [1, 1]} : vector<1x128xf32> to vector<1x32xf32>
    %110 = vector.extract_strided_slice %107 {offsets = [0, 64], sizes = [1, 32], strides = [1, 1]} : vector<1x128xf32> to vector<1x32xf32>
    %111 = vector.extract_strided_slice %106 {offsets = [0, 96], sizes = [1, 32], strides = [1, 1]} : vector<1x128xf32> to vector<1x32xf32>
    %112 = arith.mulf %109, %96 : vector<1x32xf32>
    %113 = arith.mulf %108, %110 : vector<1x32xf32>
    %114 = arith.addf %112, %113 : vector<1x32xf32>
    %115 = math.tanh %114 : vector<1x32xf32>
    %116 = arith.mulf %111, %115 : vector<1x32xf32>
    %117 = vector.extract_strided_slice %5 {offsets = [6, 0], sizes = [1, 128], strides = [1, 1]} : vector<8x128xf32> to vector<1x128xf32>
    %cst_23 = arith.constant dense<0.000000e+00> : vector<1x128xf32>
    %118 = tpu.matmul %116, %6, %cst_23 {dimension_numbers = #tpu.dot_dimension_numbers<[1], [0], [0], [1], [0, 0, 1, 1], [], []>} : vector<1x32xf32>, vector<32x128xf32>, vector<1x128xf32> -> vector<1x128xf32>
    %119 = arith.addf %117, %118 : vector<1x128xf32>
    %120 = arith.negf %119 : vector<1x128xf32>
    %121 = math.exp %120 : vector<1x128xf32>
    %cst_24 = arith.constant 1.000000e+00 : f32
    %122 = vector.broadcast %cst_24 : f32 to vector<1x128xf32>
    %123 = arith.addf %122, %121 : vector<1x128xf32>
    %124 = arith.divf %122, %123 : vector<1x128xf32>
    %125 = math.tanh %119 : vector<1x128xf32>
    %126 = vector.extract_strided_slice %124 {offsets = [0, 0], sizes = [1, 32], strides = [1, 1]} : vector<1x128xf32> to vector<1x32xf32>
    %127 = vector.extract_strided_slice %124 {offsets = [0, 32], sizes = [1, 32], strides = [1, 1]} : vector<1x128xf32> to vector<1x32xf32>
    %128 = vector.extract_strided_slice %125 {offsets = [0, 64], sizes = [1, 32], strides = [1, 1]} : vector<1x128xf32> to vector<1x32xf32>
    %129 = vector.extract_strided_slice %124 {offsets = [0, 96], sizes = [1, 32], strides = [1, 1]} : vector<1x128xf32> to vector<1x32xf32>
    %130 = arith.mulf %127, %114 : vector<1x32xf32>
    %131 = arith.mulf %126, %128 : vector<1x32xf32>
    %132 = arith.addf %130, %131 : vector<1x32xf32>
    %133 = math.tanh %132 : vector<1x32xf32>
    %134 = arith.mulf %129, %133 : vector<1x32xf32>
    %135 = vector.extract_strided_slice %5 {offsets = [7, 0], sizes = [1, 128], strides = [1, 1]} : vector<8x128xf32> to vector<1x128xf32>
    %cst_25 = arith.constant dense<0.000000e+00> : vector<1x128xf32>
    %136 = tpu.matmul %134, %6, %cst_25 {dimension_numbers = #tpu.dot_dimension_numbers<[1], [0], [0], [1], [0, 0, 1, 1], [], []>} : vector<1x32xf32>, vector<32x128xf32>, vector<1x128xf32> -> vector<1x128xf32>
    %137 = arith.addf %135, %136 : vector<1x128xf32>
    %138 = arith.negf %137 : vector<1x128xf32>
    %139 = math.exp %138 : vector<1x128xf32>
    %cst_26 = arith.constant 1.000000e+00 : f32
    %140 = vector.broadcast %cst_26 : f32 to vector<1x128xf32>
    %141 = arith.addf %140, %139 : vector<1x128xf32>
    %142 = arith.divf %140, %141 : vector<1x128xf32>
    %143 = math.tanh %137 : vector<1x128xf32>
    %144 = vector.extract_strided_slice %142 {offsets = [0, 0], sizes = [1, 32], strides = [1, 1]} : vector<1x128xf32> to vector<1x32xf32>
    %145 = vector.extract_strided_slice %142 {offsets = [0, 32], sizes = [1, 32], strides = [1, 1]} : vector<1x128xf32> to vector<1x32xf32>
    %146 = vector.extract_strided_slice %143 {offsets = [0, 64], sizes = [1, 32], strides = [1, 1]} : vector<1x128xf32> to vector<1x32xf32>
    %147 = vector.extract_strided_slice %142 {offsets = [0, 96], sizes = [1, 32], strides = [1, 1]} : vector<1x128xf32> to vector<1x32xf32>
    %148 = arith.mulf %145, %132 : vector<1x32xf32>
    %149 = arith.mulf %144, %146 : vector<1x32xf32>
    %150 = arith.addf %148, %149 : vector<1x32xf32>
    %151 = math.tanh %150 : vector<1x32xf32>
    %152 = arith.mulf %147, %151 : vector<1x32xf32>
    %c0_27 = arith.constant 0 : index
    %c0_28 = arith.constant 0 : index
    %153 = vector.load %arg6[%c0_27, %c0_28] : memref<32x128xf32, #tpu.memory_space<vmem>>, vector<32x128xf32>
    %cst_29 = arith.constant dense<0.000000e+00> : vector<1x128xf32>
    %154 = tpu.matmul %152, %153, %cst_29 {dimension_numbers = #tpu.dot_dimension_numbers<[1], [0], [0], [1], [0, 0, 1, 1], [], []>} : vector<1x32xf32>, vector<32x128xf32>, vector<1x128xf32> -> vector<1x128xf32>
    %c0_30 = arith.constant 0 : index
    %c0_31 = arith.constant 0 : index
    %155 = vector.load %arg7[%c0_30, %c0_31] : memref<1x128xf32, #tpu.memory_space<vmem>>, vector<1x128xf32>
    %156 = arith.addf %154, %155 : vector<1x128xf32>
    %c0_32 = arith.constant 0 : index
    %c0_33 = arith.constant 0 : index
    %157 = vector.load %arg8[%c0_32, %c0_33] : memref<1x128xf32, #tpu.memory_space<vmem>>, vector<1x128xf32>
    tpu.vector_store %arg8[%c0_32, %c0_33], %156 {strides = array<i32>} : memref<1x128xf32, #tpu.memory_space<vmem>>, vector<1x128xf32>,
    return
  }
}

</mosaic_0001>

<llo_original>
// kernel: tpu_custom_call.1
$region0: #{tpu_custom_call.1}
  #allocation0 [shape = 'u32[]', space=smem, size = 0x4, offset = 0x4, fixed_abs, tag = 'smem constant byte address 0x4 - core index']
  #allocation1 [shape = 'u32[144,128]{1,0:T(1,128)}', space=vmem, size = 0x12000, scoped, tag = 'internal scratch']
  %s0 = inlined_call_operand.hbm [shape: f32[8,32], index: 0, kind: input, shape index: {}]
  %s1 = inlined_call_operand.hbm [shape: f32[32,128], index: 1, kind: input, shape index: {}]
  %s2 = inlined_call_operand.hbm [shape: f32[32,128], index: 2, kind: input, shape index: {}]
  %s3 = inlined_call_operand.vmem [shape: f32[1,128], index: 3, kind: input, shape index: {}]
  %s4 = inlined_call_operand.vmem [shape: f32[1,32], index: 4, kind: input, shape index: {}]
  %s5 = inlined_call_operand.vmem [shape: f32[1,32], index: 5, kind: input, shape index: {}]
  %s6 = inlined_call_operand.hbm [shape: f32[32,128], index: 6, kind: input, shape index: {}]
  %s7 = inlined_call_operand.vmem [shape: f32[1,128], index: 7, kind: input, shape index: {}]
  %s8 = inlined_call_operand.hbm [shape: f32[1,128], index: 8, kind: output, shape index: {}]
  %s9 = sld [smem:[#allocation0]]
  $region58: #{tpu_custom_call.1} parent=0
    _
  %s11 = ssub.s32 1, %s9
  %s12 = scalar_select 0, %s11, %s9
  $region1: #{tpu_custom_call.1} parent=0
    #allocation2 [shape = 'u8[4096]{0}', space=vmem, size = 0x1000, scoped, tag = 'input window, operand 0, single buffered']
    #allocation3 [shape = 's32[1]{0}', space=sflag, size = 0x4, scoped, tag = 'scoped memory for tpu_custom_call.1']
    #allocation4 [shape = 's32[1]{0}', space=sflag, size = 0x4, scoped, tag = 'scoped memory for tpu_custom_call.1']
    #allocation5 [shape = 'u8[16384]{0}', space=vmem, size = 0x4000, scoped, tag = 'input window, operand 1, single buffered']
    #allocation6 [shape = 's32[1]{0}', space=sflag, size = 0x4, scoped, tag = 'scoped memory for tpu_custom_call.1']
    #allocation7 [shape = 'u8[16384]{0}', space=vmem, size = 0x4000, scoped, tag = 'input window, operand 2, single buffered']
    #allocation8 [shape = 'u8[16384]{0}', space=vmem, size = 0x4000, scoped, tag = 'input window, operand 6, single buffered']
    #allocation9 [shape = 's32[1]{0}', space=sflag, size = 0x4, scoped, tag = 'scoped memory for tpu_custom_call.1']
    #allocation10 [shape = 'u8[512]{0}', space=vmem, size = 0x400, scoped, tag = 'output window, operand 0, single buffered']
    %13 = vsyncpa [#allocation3], 0
    %14 = vsyncpa [#allocation6], 0
    %15 = vsyncpa [#allocation9], 0
    %16 = vsyncpa [#allocation4], 0
    // Predicated region
    $region2: #{tpu_custom_call.1} parent=1 // pred_check
      _
    $region3: #{tpu_custom_call.1} parent=1 // pred_check_branch
      %18 = sbr.rel (0) target = $region5
    $region4: #{tpu_custom_call.1} parent=1 // pred_region
      %s20 = ssub.s32 128, 128
      %21 = vsyncadd [#allocation3], %s20
      %s23 = sshll.u32 [#allocation2], 4
      %s24 = int_to_ptr.vmem [resolvable:$true] %s23
      %26 = dma.hbm_to_vmem [thread:$0]  %s0, 128, %s24, [#allocation3]
    $region5: #{tpu_custom_call.1} parent=1 // pred_fallthru
      _
    // Predicated region
    $region6: #{tpu_custom_call.1} parent=1 // pred_check
      _
    $region7: #{tpu_custom_call.1} parent=1 // pred_check_branch
      %28 = sbr.rel (0) target = $region9
    $region8: #{tpu_custom_call.1} parent=1 // pred_region
      %s30 = ssub.s32 512, 512
      %31 = vsyncadd [#allocation6], %s30
      %s32 = sshll.u32 [#allocation5], 4
      %s33 = int_to_ptr.vmem [resolvable:$true] %s32
      %38 = dma.hbm_to_vmem [thread:$0]  %s1, 512, %s33, [#allocation6], 128, 128, 8
    $region9: #{tpu_custom_call.1} parent=1 // pred_fallthru
      _
    // Predicated region
    $region10: #{tpu_custom_call.1} parent=1 // pred_check
      _
    $region11: #{tpu_custom_call.1} parent=1 // pred_check_branch
      %40 = sbr.rel (0) target = $region13
    $region12: #{tpu_custom_call.1} parent=1 // pred_region
      %s42 = ssub.s32 512, 512
      %43 = vsyncadd [#allocation6], %s42
      %s44 = sshll.u32 [#allocation7], 4
      %s45 = int_to_ptr.vmem [resolvable:$true] %s44
      %50 = dma.hbm_to_vmem [thread:$0]  %s2, 512, %s45, [#allocation6], 128, 128, 8
    $region13: #{tpu_custom_call.1} parent=1 // pred_fallthru
      _
    // Predicated region
    $region14: #{tpu_custom_call.1} parent=1 // pred_check
      _
    $region15: #{tpu_custom_call.1} parent=1 // pred_check_branch
      %52 = sbr.rel (0) target = $region17
    $region16: #{tpu_custom_call.1} parent=1 // pred_region
      _
    $region17: #{tpu_custom_call.1} parent=1 // pred_fallthru
      _
    // Predicated region
    $region18: #{tpu_custom_call.1} parent=1 // pred_check
      _
    $region19: #{tpu_custom_call.1} parent=1 // pred_check_branch
      %54 = sbr.rel (0) target = $region21
    $region20: #{tpu_custom_call.1} parent=1 // pred_region
      _
    $region21: #{tpu_custom_call.1} parent=1 // pred_fallthru
      _
    // Predicated region
    $region22: #{tpu_custom_call.1} parent=1 // pred_check
      _
    $region23: #{tpu_custom_call.1} parent=1 // pred_check_branch
      %56 = sbr.rel (0) target = $region25
    $region24: #{tpu_custom_call.1} parent=1 // pred_region
      _
    $region25: #{tpu_custom_call.1} parent=1 // pred_fallthru
      _
    // Predicated region
    $region26: #{tpu_custom_call.1} parent=1 // pred_check
      _
    $region27: #{tpu_custom_call.1} parent=1 // pred_check_branch
      %58 = sbr.rel (0) target = $region29
    $region28: #{tpu_custom_call.1} parent=1 // pred_region
      %s60 = ssub.s32 512, 512
      %61 = vsyncadd [#allocation9], %s60
      %s62 = sshll.u32 [#allocation8], 4
      %s63 = int_to_ptr.vmem [resolvable:$true] %s62
      %68 = dma.hbm_to_vmem [thread:$0]  %s6, 512, %s63, [#allocation9], 128, 128, 8
    $region29: #{tpu_custom_call.1} parent=1 // pred_fallthru
      _
    // Predicated region
    $region30: #{tpu_custom_call.1} parent=1 // pred_check
      _
    $region31: #{tpu_custom_call.1} parent=1 // pred_check_branch
      %70 = sbr.rel (0) target = $region33
    $region32: #{tpu_custom_call.1} parent=1 // pred_region
      _
    $region33: #{tpu_custom_call.1} parent=1 // pred_fallthru
      _
    // Predicated region
    $region34: #{tpu_custom_call.1} parent=1 // pred_check
      _
    $region35: #{tpu_custom_call.1} parent=1 // pred_check_branch
      %72 = sbr.rel (0) target = $region37
    $region36: #{tpu_custom_call.1} parent=1 // pred_region
      %73 = dma.done [#allocation3], 128
    $region37: #{tpu_custom_call.1} parent=1 // pred_fallthru
      _
    // Predicated region
    $region38: #{tpu_custom_call.1} parent=1 // pred_check
      _
    $region39: #{tpu_custom_call.1} parent=1 // pred_check_branch
      %75 = sbr.rel (0) target = $region41
    $region40: #{tpu_custom_call.1} parent=1 // pred_region
      %76 = dma.done [#allocation6], 512
    $region41: #{tpu_custom_call.1} parent=1 // pred_fallthru
      _
    // Predicated region
    $region42: #{tpu_custom_call.1} parent=1 // pred_check
      _
    $region43: #{tpu_custom_call.1} parent=1 // pred_check_branch
      %78 = sbr.rel (0) target = $region45
    $region44: #{tpu_custom_call.1} parent=1 // pred_region
      %79 = dma.done [#allocation6], 512
    $region45: #{tpu_custom_call.1} parent=1 // pred_fallthru
      _
    // Predicated region
    $region46: #{tpu_custom_call.1} parent=1 // pred_check
      _
    $region47: #{tpu_custom_call.1} parent=1 // pred_check_branch
      %81 = sbr.rel (0) target = $region49
    $region48: #{tpu_custom_call.1} parent=1 // pred_region
      %82 = dma.done [#allocation9], 512
    $region49: #{tpu_custom_call.1} parent=1 // pred_fallthru
      _
    %v83 = vld [vmem:[#allocation2] sm:$0xff]
    %v84 = vld [vmem:[#allocation5] sm:$0xff]
    %v85 = vld [vmem:[#allocation5 + $0x8] sm:$0xff]
    %v86 = vld [vmem:[#allocation5 + $0x10] sm:$0xff]
    %v87 = vld [vmem:[#allocation5 + $0x18] sm:$0xff]
    %v88 = vld [vmem:[%s3] sm:$0x1]
    %v90 = vlaneseq
    %v91 = vshrl.u32 %v90, 7
    %v92 = vsub.s32 0, %v91
    %v93 = vrot.slane %v88, %v92
    %vm95 = vcmask 261120
    %v97 = vsel %vm95, %v83, 0
    %99 = vmatprep.subr.mxu0 0.0
    %100 = vmatpush1.msra.mxu0 0.0
    %101 = vmatprep.subr.mxu0 0.0
    %102 = vmatpush1.msra.mxu0 0.0
    %103 = vmatprep.subr.mxu0 0.0
    %104 = vmatpush1.msra.mxu0 0.0
    %105 = vmatprep.subr.mxu0 0.0
    %106 = vmatpush1.msra.mxu0 0.0
    %107 = vmatprep.subr.mxu0 0.0
    %108 = vmatpush1.msra.mxu0 0.0
    %109 = vmatprep.subr.mxu0 0.0
    %110 = vmatpush1.msra.mxu0 0.0
    %111 = vmatprep.subr.mxu0 0.0
    %112 = vmatpush1.msra.mxu0 0.0
    %113 = vmatprep.subr.mxu0 0.0
    %114 = vmatpush1.msra.mxu0 0.0
    %115 = vmatprep.subr.mxu0 0.0
    %116 = vmatpush1.msra.mxu0 0.0
    %117 = vmatprep.subr.mxu0 0.0
    %118 = vmatpush1.msra.mxu0 0.0
    %119 = vmatprep.subr.mxu0 0.0
    %120 = vmatpush1.msra.mxu0 0.0
    %121 = vmatprep.subr.mxu0 0.0
    %122 = vmatpush1.msra.mxu0 0.0
    %123 = vmatprep.subr.mxu0 0.0
    %124 = vmatpush1.msra.mxu0 %v87
    %125 = vmatprep.subr.mxu0 0.0
    %126 = vmatpush1.msra.mxu0 %v86
    %127 = vmatprep.subr.mxu0 0.0
    %128 = vmatpush1.msra.mxu0 %v85
    %129 = vmatprep.subr.mxu0 0.0
    %130 = vmatpush1.msra.mxu0 %v84
    %131 = vmatprep.subr.mxu0 0.0
    %132 = vmatpush2.msra.mxu0 0.0
    %133 = vmatprep.subr.mxu0 0.0
    %134 = vmatpush2.msra.mxu0 0.0
    %135 = vmatprep.subr.mxu0 0.0
    %136 = vmatpush2.msra.mxu0 0.0
    %137 = vmatprep.subr.mxu0 0.0
    %138 = vmatpush2.msra.mxu0 0.0
    %139 = vmatprep.subr.mxu0 0.0
    %140 = vmatpush2.msra.mxu0 0.0
    %141 = vmatprep.subr.mxu0 0.0
    %142 = vmatpush2.msra.mxu0 0.0
    %143 = vmatprep.subr.mxu0 0.0
    %144 = vmatpush2.msra.mxu0 0.0
    %145 = vmatprep.subr.mxu0 0.0
    %146 = vmatpush2.msra.mxu0 0.0
    %147 = vmatprep.subr.mxu0 0.0
    %148 = vmatpush2.msra.mxu0 0.0
    %149 = vmatprep.subr.mxu0 0.0
    %150 = vmatpush2.msra.mxu0 0.0
    %151 = vmatprep.subr.mxu0 0.0
    %152 = vmatpush2.msra.mxu0 0.0
    %153 = vmatprep.subr.mxu0 0.0
    %154 = vmatpush2.msra.mxu0 0.0
    %155 = vmatprep.subr.mxu0 0.0
    %156 = vmatpush2.msra.mxu0 0.0
    %157 = vmatprep.subr.mxu0 0.0
    %158 = vmatpush2.msra.mxu0 0.0
    %159 = vmatprep.subr.mxu0 0.0
    %160 = vmatpush2.msra.mxu0 0.0
    %161 = vmatprep.subr.mxu0 0.0
    %162 = vmatpush2.msra.mxu0 0.0
    %163 = vmatprep.mubr.f32.mxu0 0.0
    %164 = vmatmul.mubr.f32.gmra.mxu0 %v97
    %v165 = vpop.f32.mrf.mxu0
    %v166 = vadd.f32 %v93, %v165
    %v167 = vpop.f32.mrf.mxu0
    %168 = vdwg.mxu0
    %v169 = vld [vmem:[#allocation7] sm:$0xff]
    %v170 = vld [vmem:[#allocation7 + $0x8] sm:$0xff]
    %v171 = vld [vmem:[#allocation7 + $0x10] sm:$0xff]
    %v172 = vld [vmem:[#allocation7 + $0x18] sm:$0xff]
    %v173 = vld [vmem:[%s4] sm:$0x1]
    %v174 = vld [vmem:[%s5] sm:$0x1]
    %v176 = vsel %vm95, %v173, 0
    %178 = vmatprep.subr.mxu0 0.0
    %179 = vmatpush1.msra.mxu0 0.0
    %180 = vmatprep.subr.mxu0 0.0
    %181 = vmatpush1.msra.mxu0 0.0
    %182 = vmatprep.subr.mxu0 0.0
    %183 = vmatpush1.msra.mxu0 0.0
    %184 = vmatprep.subr.mxu0 0.0
    %185 = vmatpush1.msra.mxu0 0.0
    %186 = vmatprep.subr.mxu0 0.0
    %187 = vmatpush1.msra.mxu0 0.0
    %188 = vmatprep.subr.mxu0 0.0
    %189 = vmatpush1.msra.mxu0 0.0
    %190 = vmatprep.subr.mxu0 0.0
    %191 = vmatpush1.msra.mxu0 0.0
    %192 = vmatprep.subr.mxu0 0.0
    %193 = vmatpush1.msra.mxu0 0.0
    %194 = vmatprep.subr.mxu0 0.0
    %195 = vmatpush1.msra.mxu0 0.0
    %196 = vmatprep.subr.mxu0 0.0
    %197 = vmatpush1.msra.mxu0 0.0
    %198 = vmatprep.subr.mxu0 0.0
    %199 = vmatpush1.msra.mxu0 0.0
    %200 = vmatprep.subr.mxu0 0.0
    %201 = vmatpush1.msra.mxu0 0.0
    %202 = vmatprep.subr.mxu0 0.0
    %203 = vmatpush1.msra.mxu0 %v172
    %204 = vmatprep.subr.mxu0 0.0
    %205 = vmatpush1.msra.mxu0 %v171
    %206 = vmatprep.subr.mxu0 0.0
    %207 = vmatpush1.msra.mxu0 %v170
    %208 = vmatprep.subr.mxu0 0.0
    %209 = vmatpush1.msra.mxu0 %v169
    %210 = vmatprep.subr.mxu0 0.0
    %211 = vmatpush2.msra.mxu0 0.0
    %212 = vmatprep.subr.mxu0 0.0
    %213 = vmatpush2.msra.mxu0 0.0
    %214 = vmatprep.subr.mxu0 0.0
    %215 = vmatpush2.msra.mxu0 0.0
    %216 = vmatprep.subr.mxu0 0.0
    %217 = vmatpush2.msra.mxu0 0.0
    %218 = vmatprep.subr.mxu0 0.0
    %219 = vmatpush2.msra.mxu0 0.0
    %220 = vmatprep.subr.mxu0 0.0
    %221 = vmatpush2.msra.mxu0 0.0
    %222 = vmatprep.subr.mxu0 0.0
    %223 = vmatpush2.msra.mxu0 0.0
    %224 = vmatprep.subr.mxu0 0.0
    %225 = vmatpush2.msra.mxu0 0.0
    %226 = vmatprep.subr.mxu0 0.0
    %227 = vmatpush2.msra.mxu0 0.0
    %228 = vmatprep.subr.mxu0 0.0
    %229 = vmatpush2.msra.mxu0 0.0
    %230 = vmatprep.subr.mxu0 0.0
    %231 = vmatpush2.msra.mxu0 0.0
    %232 = vmatprep.subr.mxu0 0.0
    %233 = vmatpush2.msra.mxu0 0.0
    %234 = vmatprep.subr.mxu0 0.0
    %235 = vmatpush2.msra.mxu0 0.0
    %236 = vmatprep.subr.mxu0 0.0
    %237 = vmatpush2.msra.mxu0 0.0
    %238 = vmatprep.subr.mxu0 0.0
    %239 = vmatpush2.msra.mxu0 0.0
    %240 = vmatprep.subr.mxu0 0.0
    %241 = vmatpush2.msra.mxu0 0.0
    %242 = vmatprep.mubr.f32.mxu0 0.0
    %243 = vmatmul.mubr.f32.gmra.mxu0 %v176
    %v244 = vpop.f32.mrf.mxu0
    %v245 = vadd.f32 0.0, %v244
    %v246 = vpop.f32.mrf.mxu0
    %247 = vdwg.mxu0
    %v248 = vadd.f32 %v166, %v245
    %v249 = vxor.u32 %v248, 2147483648
    %v250 = vmul.f32 %v249, 1.442695
    %v251 = vpow.pop %v250
    %v252 = vadd.f32 %v251, 1.0
    %v253 = vrcp.pop %v252
    %v254 = vmul.f32 1.0, %v253
    %v255 = vtanh.pop %v248
    %v257 = vlaneseq
    %v258 = vshrl.u32 %v257, 7
    %v259 = vsub.s32 0, %v258
    %v260 = vrot.slane %v174, %v259
    %261 = vrot.lane.b32.xlu0 %v260, 32
    %v262 = vpop.permute.xlu0 %261
    %v264 = vmul.f32 %v254, %v262
    %266 = vrot.lane.b32.xlu0 %v255, 64
    %v267 = vpop.permute.xlu0 %266
    %v269 = vmul.f32 %v254, %v267
    %271 = vrot.lane.b32.xlu0 %v269, 32
    %v272 = vpop.permute.xlu0 %271
    %v274 = vadd.f32 %v264, %v272
    %v275 = vtanh.pop %v274
    %277 = vrot.lane.b32.xlu0 %v275, 64
    %v278 = vpop.permute.xlu0 %277
    %v280 = vmul.f32 %v254, %v278
    %282 = vrot.lane.b32.xlu0 %v280, 32
    %v283 = vpop.permute.xlu0 %282
    %v284 = vsel %vm95, %v283, 0
    %286 = vmatprep.subr.mxu0 0.0
    %287 = vmatpush1.msra.mxu0 0.0
    %288 = vmatprep.subr.mxu0 0.0
    %289 = vmatpush1.msra.mxu0 0.0
    %290 = vmatprep.subr.mxu0 0.0
    %291 = vmatpush1.msra.mxu0 0.0
    %292 = vmatprep.subr.mxu0 0.0
    %293 = vmatpush1.msra.mxu0 0.0
    %294 = vmatprep.subr.mxu0 0.0
    %295 = vmatpush1.msra.mxu0 0.0
    %296 = vmatprep.subr.mxu0 0.0
    %297 = vmatpush1.msra.mxu0 0.0
    %298 = vmatprep.subr.mxu0 0.0
    %299 = vmatpush1.msra.mxu0 0.0
    %300 = vmatprep.subr.mxu0 0.0
    %301 = vmatpush1.msra.mxu0 0.0
    %302 = vmatprep.subr.mxu0 0.0
    %303 = vmatpush1.msra.mxu0 0.0
    %304 = vmatprep.subr.mxu0 0.0
    %305 = vmatpush1.msra.mxu0 0.0
    %306 = vmatprep.subr.mxu0 0.0
    %307 = vmatpush1.msra.mxu0 0.0
    %308 = vmatprep.subr.mxu0 0.0
    %309 = vmatpush1.msra.mxu0 0.0
    %310 = vmatprep.subr.mxu0 0.0
    %311 = vmatpush1.msra.mxu0 %v172
    %312 = vmatprep.subr.mxu0 0.0
    %313 = vmatpush1.msra.mxu0 %v171
    %314 = vmatprep.subr.mxu0 0.0
    %315 = vmatpush1.msra.mxu0 %v170
    %316 = vmatprep.subr.mxu0 0.0
    %317 = vmatpush1.msra.mxu0 %v169
    %318 = vmatprep.subr.mxu0 0.0
    %319 = vmatpush2.msra.mxu0 0.0
    %320 = vmatprep.subr.mxu0 0.0
    %321 = vmatpush2.msra.mxu0 0.0
    %322 = vmatprep.subr.mxu0 0.0
    %323 = vmatpush2.msra.mxu0 0.0
    %324 = vmatprep.subr.mxu0 0.0
    %325 = vmatpush2.msra.mxu0 0.0
    %326 = vmatprep.subr.mxu0 0.0
    %327 = vmatpush2.msra.mxu0 0.0
    %328 = vmatprep.subr.mxu0 0.0
    %329 = vmatpush2.msra.mxu0 0.0
    %330 = vmatprep.subr.mxu0 0.0
    %331 = vmatpush2.msra.mxu0 0.0
    %332 = vmatprep.subr.mxu0 0.0
    %333 = vmatpush2.msra.mxu0 0.0
    %334 = vmatprep.subr.mxu0 0.0
    %335 = vmatpush2.msra.mxu0 0.0
    %336 = vmatprep.subr.mxu0 0.0
    %337 = vmatpush2.msra.mxu0 0.0
    %338 = vmatprep.subr.mxu0 0.0
    %339 = vmatpush2.msra.mxu0 0.0
    %340 = vmatprep.subr.mxu0 0.0
    %341 = vmatpush2.msra.mxu0 0.0
    %342 = vmatprep.subr.mxu0 0.0
    %343 = vmatpush2.msra.mxu0 0.0
    %344 = vmatprep.subr.mxu0 0.0
    %345 = vmatpush2.msra.mxu0 0.0
    %346 = vmatprep.subr.mxu0 0.0
    %347 = vmatpush2.msra.mxu0 0.0
    %348 = vmatprep.subr.mxu0 0.0
    %349 = vmatpush2.msra.mxu0 0.0
    %350 = vmatprep.mubr.f32.mxu0 0.0
    %351 = vmatmul.mubr.f32.gmra.mxu0 %v284
    %v352 = vpop.f32.mrf.mxu0
    %v353 = vadd.f32 0.0, %v352
    %v354 = vpop.f32.mrf.mxu0
    %355 = vdwg.mxu0
    %v357 = vrot.slane %v353, 7
    %v359 = vadd.f32 %v166, %v357
    %v360 = vxor.u32 %v359, 2147483648
    %v361 = vmul.f32 %v360, 1.442695
    %v362 = vpow.pop %v361
    %v363 = vadd.f32 %v362, 1.0
    %v364 = vrcp.pop %v363
    %v365 = vmul.f32 1.0, %v364
    %v366 = vtanh.pop %v359
    %v368 = vrot.slane %v274, 7
    %v370 = vmul.f32 %v365, %v368
    %372 = vrot.lane.b32.xlu0 %v366, 64
    %v373 = vpop.permute.xlu0 %372
    %v375 = vmul.f32 %v365, %v373
    %377 = vrot.lane.b32.xlu0 %v375, 32
    %v378 = vpop.permute.xlu0 %377
    %v380 = vadd.f32 %v370, %v378
    %v381 = vtanh.pop %v380
    %383 = vrot.lane.b32.xlu0 %v381, 64
    %v384 = vpop.permute.xlu0 %383
    %v386 = vmul.f32 %v365, %v384
    %v388 = vrot.slane %v386, 1
    %389 = vrot.lane.b32.xlu0 %v388, 32
    %v390 = vpop.permute.xlu0 %389
    %v391 = vsel %vm95, %v390, 0
    %393 = vmatprep.subr.mxu0 0.0
    %394 = vmatpush1.msra.mxu0 0.0
    %395 = vmatprep.subr.mxu0 0.0
    %396 = vmatpush1.msra.mxu0 0.0
    %397 = vmatprep.subr.mxu0 0.0
    %398 = vmatpush1.msra.mxu0 0.0
    %399 = vmatprep.subr.mxu0 0.0
    %400 = vmatpush1.msra.mxu0 0.0
    %401 = vmatprep.subr.mxu0 0.0
    %402 = vmatpush1.msra.mxu0 0.0
    %403 = vmatprep.subr.mxu0 0.0
    %404 = vmatpush1.msra.mxu0 0.0
    %405 = vmatprep.subr.mxu0 0.0
    %406 = vmatpush1.msra.mxu0 0.0
    %407 = vmatprep.subr.mxu0 0.0
    %408 = vmatpush1.msra.mxu0 0.0
    %409 = vmatprep.subr.mxu0 0.0
    %410 = vmatpush1.msra.mxu0 0.0
    %411 = vmatprep.subr.mxu0 0.0
    %412 = vmatpush1.msra.mxu0 0.0
    %413 = vmatprep.subr.mxu0 0.0
    %414 = vmatpush1.msra.mxu0 0.0
    %415 = vmatprep.subr.mxu0 0.0
    %416 = vmatpush1.msra.mxu0 0.0
    %417 = vmatprep.subr.mxu0 0.0
    %418 = vmatpush1.msra.mxu0 %v172
    %419 = vmatprep.subr.mxu0 0.0
    %420 = vmatpush1.msra.mxu0 %v171
    %421 = vmatprep.subr.mxu0 0.0
    %422 = vmatpush1.msra.mxu0 %v170
    %423 = vmatprep.subr.mxu0 0.0
    %424 = vmatpush1.msra.mxu0 %v169
    %425 = vmatprep.subr.mxu0 0.0
    %426 = vmatpush2.msra.mxu0 0.0
    %427 = vmatprep.subr.mxu0 0.0
    %428 = vmatpush2.msra.mxu0 0.0
    %429 = vmatprep.subr.mxu0 0.0
    %430 = vmatpush2.msra.mxu0 0.0
    %431 = vmatprep.subr.mxu0 0.0
    %432 = vmatpush2.msra.mxu0 0.0
    %433 = vmatprep.subr.mxu0 0.0
    %434 = vmatpush2.msra.mxu0 0.0
    %435 = vmatprep.subr.mxu0 0.0
    %436 = vmatpush2.msra.mxu0 0.0
    %437 = vmatprep.subr.mxu0 0.0
    %438 = vmatpush2.msra.mxu0 0.0
    %439 = vmatprep.subr.mxu0 0.0
    %440 = vmatpush2.msra.mxu0 0.0
    %441 = vmatprep.subr.mxu0 0.0
    %442 = vmatpush2.msra.mxu0 0.0
    %443 = vmatprep.subr.mxu0 0.0
    %444 = vmatpush2.msra.mxu0 0.0
    %445 = vmatprep.subr.mxu0 0.0
    %446 = vmatpush2.msra.mxu0 0.0
    %447 = vmatprep.subr.mxu0 0.0
    %448 = vmatpush2.msra.mxu0 0.0
    %449 = vmatprep.subr.mxu0 0.0
    %450 = vmatpush2.msra.mxu0 0.0
    %451 = vmatprep.subr.mxu0 0.0
    %452 = vmatpush2.msra.mxu0 0.0
    %453 = vmatprep.subr.mxu0 0.0
    %454 = vmatpush2.msra.mxu0 0.0
    %455 = vmatprep.subr.mxu0 0.0
    %456 = vmatpush2.msra.mxu0 0.0
    %457 = vmatprep.mubr.f32.mxu0 0.0
    %458 = vmatmul.mubr.f32.gmra.mxu0 %v391
    %v459 = vpop.f32.mrf.mxu0
    %v460 = vadd.f32 0.0, %v459
    %v461 = vpop.f32.mrf.mxu0
    %462 = vdwg.mxu0
    %v464 = vrot.slane %v460, 6
    %v466 = vadd.f32 %v166, %v464
    %v467 = vxor.u32 %v466, 2147483648
    %v468 = vmul.f32 %v467, 1.442695
    %v469 = vpow.pop %v468
    %v470 = vadd.f32 %v469, 1.0
    %v471 = vrcp.pop %v470
    %v472 = vmul.f32 1.0, %v471
    %v473 = vtanh.pop %v466
    %v475 = vrot.slane %v380, 7
    %v477 = vmul.f32 %v472, %v475
    %479 = vrot.lane.b32.xlu0 %v473, 64
    %v480 = vpop.permute.xlu0 %479
    %v482 = vmul.f32 %v472, %v480
    %484 = vrot.lane.b32.xlu0 %v482, 32
    %v485 = vpop.permute.xlu0 %484
    %v487 = vadd.f32 %v477, %v485
    %v488 = vtanh.pop %v487
    %490 = vrot.lane.b32.xlu0 %v488, 64
    %v491 = vpop.permute.xlu0 %490
    %v493 = vmul.f32 %v472, %v491
    %v495 = vrot.slane %v493, 2
    %496 = vrot.lane.b32.xlu0 %v495, 32
    %v497 = vpop.permute.xlu0 %496
    %v498 = vsel %vm95, %v497, 0
    %500 = vmatprep.subr.mxu0 0.0
    %501 = vmatpush1.msra.mxu0 0.0
    %502 = vmatprep.subr.mxu0 0.0
    %503 = vmatpush1.msra.mxu0 0.0
    %504 = vmatprep.subr.mxu0 0.0
    %505 = vmatpush1.msra.mxu0 0.0
    %506 = vmatprep.subr.mxu0 0.0
    %507 = vmatpush1.msra.mxu0 0.0
    %508 = vmatprep.subr.mxu0 0.0
    %509 = vmatpush1.msra.mxu0 0.0
    %510 = vmatprep.subr.mxu0 0.0
    %511 = vmatpush1.msra.mxu0 0.0
    %512 = vmatprep.subr.mxu0 0.0
    %513 = vmatpush1.msra.mxu0 0.0
    %514 = vmatprep.subr.mxu0 0.0
    %515 = vmatpush1.msra.mxu0 0.0
    %516 = vmatprep.subr.mxu0 0.0
    %517 = vmatpush1.msra.mxu0 0.0
    %518 = vmatprep.subr.mxu0 0.0
    %519 = vmatpush1.msra.mxu0 0.0
    %520 = vmatprep.subr.mxu0 0.0
    %521 = vmatpush1.msra.mxu0 0.0
    %522 = vmatprep.subr.mxu0 0.0
    %523 = vmatpush1.msra.mxu0 0.0
    %524 = vmatprep.subr.mxu0 0.0
    %525 = vmatpush1.msra.mxu0 %v172
    %526 = vmatprep.subr.mxu0 0.0
    %527 = vmatpush1.msra.mxu0 %v171
    %528 = vmatprep.subr.mxu0 0.0
    %529 = vmatpush1.msra.mxu0 %v170
    %530 = vmatprep.subr.mxu0 0.0
    %531 = vmatpush1.msra.mxu0 %v169
    %532 = vmatprep.subr.mxu0 0.0
    %533 = vmatpush2.msra.mxu0 0.0
    %534 = vmatprep.subr.mxu0 0.0
    %535 = vmatpush2.msra.mxu0 0.0
    %536 = vmatprep.subr.mxu0 0.0
    %537 = vmatpush2.msra.mxu0 0.0
    %538 = vmatprep.subr.mxu0 0.0
    %539 = vmatpush2.msra.mxu0 0.0
    %540 = vmatprep.subr.mxu0 0.0
    %541 = vmatpush2.msra.mxu0 0.0
    %542 = vmatprep.subr.mxu0 0.0
    %543 = vmatpush2.msra.mxu0 0.0
    %544 = vmatprep.subr.mxu0 0.0
    %545 = vmatpush2.msra.mxu0 0.0
    %546 = vmatprep.subr.mxu0 0.0
    %547 = vmatpush2.msra.mxu0 0.0
    %548 = vmatprep.subr.mxu0 0.0
    %549 = vmatpush2.msra.mxu0 0.0
    %550 = vmatprep.subr.mxu0 0.0
    %551 = vmatpush2.msra.mxu0 0.0
    %552 = vmatprep.subr.mxu0 0.0
    %553 = vmatpush2.msra.mxu0 0.0
    %554 = vmatprep.subr.mxu0 0.0
    %555 = vmatpush2.msra.mxu0 0.0
    %556 = vmatprep.subr.mxu0 0.0
    %557 = vmatpush2.msra.mxu0 0.0
    %558 = vmatprep.subr.mxu0 0.0
    %559 = vmatpush2.msra.mxu0 0.0
    %560 = vmatprep.subr.mxu0 0.0
    %561 = vmatpush2.msra.mxu0 0.0
    %562 = vmatprep.subr.mxu0 0.0
    %563 = vmatpush2.msra.mxu0 0.0
    %564 = vmatprep.mubr.f32.mxu0 0.0
    %565 = vmatmul.mubr.f32.gmra.mxu0 %v498
    %v566 = vpop.f32.mrf.mxu0
    %v567 = vadd.f32 0.0, %v566
    %v568 = vpop.f32.mrf.mxu0
    %569 = vdwg.mxu0
    %v571 = vrot.slane %v567, 5
    %v573 = vadd.f32 %v166, %v571
    %v574 = vxor.u32 %v573, 2147483648
    %v575 = vmul.f32 %v574, 1.442695
    %v576 = vpow.pop %v575
    %v577 = vadd.f32 %v576, 1.0
    %v578 = vrcp.pop %v577
    %v579 = vmul.f32 1.0, %v578
    %v580 = vtanh.pop %v573
    %v582 = vrot.slane %v487, 7
    %v584 = vmul.f32 %v579, %v582
    %586 = vrot.lane.b32.xlu0 %v580, 64
    %v587 = vpop.permute.xlu0 %586
    %v589 = vmul.f32 %v579, %v587
    %591 = vrot.lane.b32.xlu0 %v589, 32
    %v592 = vpop.permute.xlu0 %591
    %v594 = vadd.f32 %v584, %v592
    %v595 = vtanh.pop %v594
    %597 = vrot.lane.b32.xlu0 %v595, 64
    %v598 = vpop.permute.xlu0 %597
    %v600 = vmul.f32 %v579, %v598
    %v602 = vrot.slane %v600, 3
    %603 = vrot.lane.b32.xlu0 %v602, 32
    %v604 = vpop.permute.xlu0 %603
    %v605 = vsel %vm95, %v604, 0
    %607 = vmatprep.subr.mxu0 0.0
    %608 = vmatpush1.msra.mxu0 0.0
    %609 = vmatprep.subr.mxu0 0.0
    %610 = vmatpush1.msra.mxu0 0.0
    %611 = vmatprep.subr.mxu0 0.0
    %612 = vmatpush1.msra.mxu0 0.0
    %613 = vmatprep.subr.mxu0 0.0
    %614 = vmatpush1.msra.mxu0 0.0
    %615 = vmatprep.subr.mxu0 0.0
    %616 = vmatpush1.msra.mxu0 0.0
    %617 = vmatprep.subr.mxu0 0.0
    %618 = vmatpush1.msra.mxu0 0.0
    %619 = vmatprep.subr.mxu0 0.0
    %620 = vmatpush1.msra.mxu0 0.0
    %621 = vmatprep.subr.mxu0 0.0
    %622 = vmatpush1.msra.mxu0 0.0
    %623 = vmatprep.subr.mxu0 0.0
    %624 = vmatpush1.msra.mxu0 0.0
    %625 = vmatprep.subr.mxu0 0.0
    %626 = vmatpush1.msra.mxu0 0.0
    %627 = vmatprep.subr.mxu0 0.0
    %628 = vmatpush1.msra.mxu0 0.0
    %629 = vmatprep.subr.mxu0 0.0
    %630 = vmatpush1.msra.mxu0 0.0
    %631 = vmatprep.subr.mxu0 0.0
    %632 = vmatpush1.msra.mxu0 %v172
    %633 = vmatprep.subr.mxu0 0.0
    %634 = vmatpush1.msra.mxu0 %v171
    %635 = vmatprep.subr.mxu0 0.0
    %636 = vmatpush1.msra.mxu0 %v170
    %637 = vmatprep.subr.mxu0 0.0
    %638 = vmatpush1.msra.mxu0 %v169
    %639 = vmatprep.subr.mxu0 0.0
    %640 = vmatpush2.msra.mxu0 0.0
    %641 = vmatprep.subr.mxu0 0.0
    %642 = vmatpush2.msra.mxu0 0.0
    %643 = vmatprep.subr.mxu0 0.0
    %644 = vmatpush2.msra.mxu0 0.0
    %645 = vmatprep.subr.mxu0 0.0
    %646 = vmatpush2.msra.mxu0 0.0
    %647 = vmatprep.subr.mxu0 0.0
    %648 = vmatpush2.msra.mxu0 0.0
    %649 = vmatprep.subr.mxu0 0.0
    %650 = vmatpush2.msra.mxu0 0.0
    %651 = vmatprep.subr.mxu0 0.0
    %652 = vmatpush2.msra.mxu0 0.0
    %653 = vmatprep.subr.mxu0 0.0
    %654 = vmatpush2.msra.mxu0 0.0
    %655 = vmatprep.subr.mxu0 0.0
    %656 = vmatpush2.msra.mxu0 0.0
    %657 = vmatprep.subr.mxu0 0.0
    %658 = vmatpush2.msra.mxu0 0.0
    %659 = vmatprep.subr.mxu0 0.0
    %660 = vmatpush2.msra.mxu0 0.0
    %661 = vmatprep.subr.mxu0 0.0
    %662 = vmatpush2.msra.mxu0 0.0
    %663 = vmatprep.subr.mxu0 0.0
    %664 = vmatpush2.msra.mxu0 0.0
    %665 = vmatprep.subr.mxu0 0.0
    %666 = vmatpush2.msra.mxu0 0.0
    %667 = vmatprep.subr.mxu0 0.0
    %668 = vmatpush2.msra.mxu0 0.0
    %669 = vmatprep.subr.mxu0 0.0
    %670 = vmatpush2.msra.mxu0 0.0
    %671 = vmatprep.mubr.f32.mxu0 0.0
    %672 = vmatmul.mubr.f32.gmra.mxu0 %v605
    %v673 = vpop.f32.mrf.mxu0
    %v674 = vadd.f32 0.0, %v673
    %v675 = vpop.f32.mrf.mxu0
    %676 = vdwg.mxu0
    %v678 = vrot.slane %v674, 4
    %v680 = vadd.f32 %v166, %v678
    %v681 = vxor.u32 %v680, 2147483648
    %v682 = vmul.f32 %v681, 1.442695
    %v683 = vpow.pop %v682
    %v684 = vadd.f32 %v683, 1.0
    %v685 = vrcp.pop %v684
    %v686 = vmul.f32 1.0, %v685
    %v687 = vtanh.pop %v680
    %v689 = vrot.slane %v594, 7
    %v691 = vmul.f32 %v686, %v689
    %693 = vrot.lane.b32.xlu0 %v687, 64
    %v694 = vpop.permute.xlu0 %693
    %v696 = vmul.f32 %v686, %v694
    %698 = vrot.lane.b32.xlu0 %v696, 32
    %v699 = vpop.permute.xlu0 %698
    %v701 = vadd.f32 %v691, %v699
    %v702 = vtanh.pop %v701
    %704 = vrot.lane.b32.xlu0 %v702, 64
    %v705 = vpop.permute.xlu0 %704
    %v707 = vmul.f32 %v686, %v705
    %v709 = vrot.slane %v707, 4
    %710 = vrot.lane.b32.xlu0 %v709, 32
    %v711 = vpop.permute.xlu0 %710
    %v712 = vsel %vm95, %v711, 0
    %714 = vmatprep.subr.mxu0 0.0
    %715 = vmatpush1.msra.mxu0 0.0
    %716 = vmatprep.subr.mxu0 0.0
    %717 = vmatpush1.msra.mxu0 0.0
    %718 = vmatprep.subr.mxu0 0.0
    %719 = vmatpush1.msra.mxu0 0.0
    %720 = vmatprep.subr.mxu0 0.0
    %721 = vmatpush1.msra.mxu0 0.0
    %722 = vmatprep.subr.mxu0 0.0
    %723 = vmatpush1.msra.mxu0 0.0
    %724 = vmatprep.subr.mxu0 0.0
    %725 = vmatpush1.msra.mxu0 0.0
    %726 = vmatprep.subr.mxu0 0.0
    %727 = vmatpush1.msra.mxu0 0.0
    %728 = vmatprep.subr.mxu0 0.0
    %729 = vmatpush1.msra.mxu0 0.0
    %730 = vmatprep.subr.mxu0 0.0
    %731 = vmatpush1.msra.mxu0 0.0
    %732 = vmatprep.subr.mxu0 0.0
    %733 = vmatpush1.msra.mxu0 0.0
    %734 = vmatprep.subr.mxu0 0.0
    %735 = vmatpush1.msra.mxu0 0.0
    %736 = vmatprep.subr.mxu0 0.0
    %737 = vmatpush1.msra.mxu0 0.0
    %738 = vmatprep.subr.mxu0 0.0
    %739 = vmatpush1.msra.mxu0 %v172
    %740 = vmatprep.subr.mxu0 0.0
    %741 = vmatpush1.msra.mxu0 %v171
    %742 = vmatprep.subr.mxu0 0.0
    %743 = vmatpush1.msra.mxu0 %v170
    %744 = vmatprep.subr.mxu0 0.0
    %745 = vmatpush1.msra.mxu0 %v169
    %746 = vmatprep.subr.mxu0 0.0
    %747 = vmatpush2.msra.mxu0 0.0
    %748 = vmatprep.subr.mxu0 0.0
    %749 = vmatpush2.msra.mxu0 0.0
    %750 = vmatprep.subr.mxu0 0.0
    %751 = vmatpush2.msra.mxu0 0.0
    %752 = vmatprep.subr.mxu0 0.0
    %753 = vmatpush2.msra.mxu0 0.0
    %754 = vmatprep.subr.mxu0 0.0
    %755 = vmatpush2.msra.mxu0 0.0
    %756 = vmatprep.subr.mxu0 0.0
    %757 = vmatpush2.msra.mxu0 0.0
    %758 = vmatprep.subr.mxu0 0.0
    %759 = vmatpush2.msra.mxu0 0.0
    %760 = vmatprep.subr.mxu0 0.0
    %761 = vmatpush2.msra.mxu0 0.0
    %762 = vmatprep.subr.mxu0 0.0
    %763 = vmatpush2.msra.mxu0 0.0
    %764 = vmatprep.subr.mxu0 0.0
    %765 = vmatpush2.msra.mxu0 0.0
    %766 = vmatprep.subr.mxu0 0.0
    %767 = vmatpush2.msra.mxu0 0.0
    %768 = vmatprep.subr.mxu0 0.0
    %769 = vmatpush2.msra.mxu0 0.0
    %770 = vmatprep.subr.mxu0 0.0
    %771 = vmatpush2.msra.mxu0 0.0
    %772 = vmatprep.subr.mxu0 0.0
    %773 = vmatpush2.msra.mxu0 0.0
    %774 = vmatprep.subr.mxu0 0.0
    %775 = vmatpush2.msra.mxu0 0.0
    %776 = vmatprep.subr.mxu0 0.0
    %777 = vmatpush2.msra.mxu0 0.0
    %778 = vmatprep.mubr.f32.mxu0 0.0
    %779 = vmatmul.mubr.f32.gmra.mxu0 %v712
    %v780 = vpop.f32.mrf.mxu0
    %v781 = vadd.f32 0.0, %v780
    %v782 = vpop.f32.mrf.mxu0
    %783 = vdwg.mxu0
    %v785 = vrot.slane %v781, 3
    %v787 = vadd.f32 %v166, %v785
    %v788 = vxor.u32 %v787, 2147483648
    %v789 = vmul.f32 %v788, 1.442695
    %v790 = vpow.pop %v789
    %v791 = vadd.f32 %v790, 1.0
    %v792 = vrcp.pop %v791
    %v793 = vmul.f32 1.0, %v792
    %v794 = vtanh.pop %v787
    %v796 = vrot.slane %v701, 7
    %v798 = vmul.f32 %v793, %v796
    %800 = vrot.lane.b32.xlu0 %v794, 64
    %v801 = vpop.permute.xlu0 %800
    %v803 = vmul.f32 %v793, %v801
    %805 = vrot.lane.b32.xlu0 %v803, 32
    %v806 = vpop.permute.xlu0 %805
    %v808 = vadd.f32 %v798, %v806
    %v809 = vtanh.pop %v808
    %811 = vrot.lane.b32.xlu0 %v809, 64
    %v812 = vpop.permute.xlu0 %811
    %v814 = vmul.f32 %v793, %v812
    %v816 = vrot.slane %v814, 5
    %817 = vrot.lane.b32.xlu0 %v816, 32
    %v818 = vpop.permute.xlu0 %817
    %v819 = vsel %vm95, %v818, 0
    %821 = vmatprep.subr.mxu0 0.0
    %822 = vmatpush1.msra.mxu0 0.0
    %823 = vmatprep.subr.mxu0 0.0
    %824 = vmatpush1.msra.mxu0 0.0
    %825 = vmatprep.subr.mxu0 0.0
    %826 = vmatpush1.msra.mxu0 0.0
    %827 = vmatprep.subr.mxu0 0.0
    %828 = vmatpush1.msra.mxu0 0.0
    %829 = vmatprep.subr.mxu0 0.0
    %830 = vmatpush1.msra.mxu0 0.0
    %831 = vmatprep.subr.mxu0 0.0
    %832 = vmatpush1.msra.mxu0 0.0
    %833 = vmatprep.subr.mxu0 0.0
    %834 = vmatpush1.msra.mxu0 0.0
    %835 = vmatprep.subr.mxu0 0.0
    %836 = vmatpush1.msra.mxu0 0.0
    %837 = vmatprep.subr.mxu0 0.0
    %838 = vmatpush1.msra.mxu0 0.0
    %839 = vmatprep.subr.mxu0 0.0
    %840 = vmatpush1.msra.mxu0 0.0
    %841 = vmatprep.subr.mxu0 0.0
    %842 = vmatpush1.msra.mxu0 0.0
    %843 = vmatprep.subr.mxu0 0.0
    %844 = vmatpush1.msra.mxu0 0.0
    %845 = vmatprep.subr.mxu0 0.0
    %846 = vmatpush1.msra.mxu0 %v172
    %847 = vmatprep.subr.mxu0 0.0
    %848 = vmatpush1.msra.mxu0 %v171
    %849 = vmatprep.subr.mxu0 0.0
    %850 = vmatpush1.msra.mxu0 %v170
    %851 = vmatprep.subr.mxu0 0.0
    %852 = vmatpush1.msra.mxu0 %v169
    %853 = vmatprep.subr.mxu0 0.0
    %854 = vmatpush2.msra.mxu0 0.0
    %855 = vmatprep.subr.mxu0 0.0
    %856 = vmatpush2.msra.mxu0 0.0
    %857 = vmatprep.subr.mxu0 0.0
    %858 = vmatpush2.msra.mxu0 0.0
    %859 = vmatprep.subr.mxu0 0.0
    %860 = vmatpush2.msra.mxu0 0.0
    %861 = vmatprep.subr.mxu0 0.0
    %862 = vmatpush2.msra.mxu0 0.0
    %863 = vmatprep.subr.mxu0 0.0
    %864 = vmatpush2.msra.mxu0 0.0
    %865 = vmatprep.subr.mxu0 0.0
    %866 = vmatpush2.msra.mxu0 0.0
    %867 = vmatprep.subr.mxu0 0.0
    %868 = vmatpush2.msra.mxu0 0.0
    %869 = vmatprep.subr.mxu0 0.0
    %870 = vmatpush2.msra.mxu0 0.0
    %871 = vmatprep.subr.mxu0 0.0
    %872 = vmatpush2.msra.mxu0 0.0
    %873 = vmatprep.subr.mxu0 0.0
    %874 = vmatpush2.msra.mxu0 0.0
    %875 = vmatprep.subr.mxu0 0.0
    %876 = vmatpush2.msra.mxu0 0.0
    %877 = vmatprep.subr.mxu0 0.0
    %878 = vmatpush2.msra.mxu0 0.0
    %879 = vmatprep.subr.mxu0 0.0
    %880 = vmatpush2.msra.mxu0 0.0
    %881 = vmatprep.subr.mxu0 0.0
    %882 = vmatpush2.msra.mxu0 0.0
    %883 = vmatprep.subr.mxu0 0.0
    %884 = vmatpush2.msra.mxu0 0.0
    %885 = vmatprep.mubr.f32.mxu0 0.0
    %886 = vmatmul.mubr.f32.gmra.mxu0 %v819
    %v887 = vpop.f32.mrf.mxu0
    %v888 = vadd.f32 0.0, %v887
    %v889 = vpop.f32.mrf.mxu0
    %890 = vdwg.mxu0
    %v892 = vrot.slane %v888, 2
    %v894 = vadd.f32 %v166, %v892
    %v895 = vxor.u32 %v894, 2147483648
    %v896 = vmul.f32 %v895, 1.442695
    %v897 = vpow.pop %v896
    %v898 = vadd.f32 %v897, 1.0
    %v899 = vrcp.pop %v898
    %v900 = vmul.f32 1.0, %v899
    %v901 = vtanh.pop %v894
    %v903 = vrot.slane %v808, 7
    %v905 = vmul.f32 %v900, %v903
    %907 = vrot.lane.b32.xlu0 %v901, 64
    %v908 = vpop.permute.xlu0 %907
    %v910 = vmul.f32 %v900, %v908
    %912 = vrot.lane.b32.xlu0 %v910, 32
    %v913 = vpop.permute.xlu0 %912
    %v915 = vadd.f32 %v905, %v913
    %v916 = vtanh.pop %v915
    %918 = vrot.lane.b32.xlu0 %v916, 64
    %v919 = vpop.permute.xlu0 %918
    %v921 = vmul.f32 %v900, %v919
    %v923 = vrot.slane %v921, 6
    %924 = vrot.lane.b32.xlu0 %v923, 32
    %v925 = vpop.permute.xlu0 %924
    %v926 = vsel %vm95, %v925, 0
    %928 = vmatprep.subr.mxu0 0.0
    %929 = vmatpush1.msra.mxu0 0.0
    %930 = vmatprep.subr.mxu0 0.0
    %931 = vmatpush1.msra.mxu0 0.0
    %932 = vmatprep.subr.mxu0 0.0
    %933 = vmatpush1.msra.mxu0 0.0
    %934 = vmatprep.subr.mxu0 0.0
    %935 = vmatpush1.msra.mxu0 0.0
    %936 = vmatprep.subr.mxu0 0.0
    %937 = vmatpush1.msra.mxu0 0.0
    %938 = vmatprep.subr.mxu0 0.0
    %939 = vmatpush1.msra.mxu0 0.0
    %940 = vmatprep.subr.mxu0 0.0
    %941 = vmatpush1.msra.mxu0 0.0
    %942 = vmatprep.subr.mxu0 0.0
    %943 = vmatpush1.msra.mxu0 0.0
    %944 = vmatprep.subr.mxu0 0.0
    %945 = vmatpush1.msra.mxu0 0.0
    %946 = vmatprep.subr.mxu0 0.0
    %947 = vmatpush1.msra.mxu0 0.0
    %948 = vmatprep.subr.mxu0 0.0
    %949 = vmatpush1.msra.mxu0 0.0
    %950 = vmatprep.subr.mxu0 0.0
    %951 = vmatpush1.msra.mxu0 0.0
    %952 = vmatprep.subr.mxu0 0.0
    %953 = vmatpush1.msra.mxu0 %v172
    %954 = vmatprep.subr.mxu0 0.0
    %955 = vmatpush1.msra.mxu0 %v171
    %956 = vmatprep.subr.mxu0 0.0
    %957 = vmatpush1.msra.mxu0 %v170
    %958 = vmatprep.subr.mxu0 0.0
    %959 = vmatpush1.msra.mxu0 %v169
    %960 = vmatprep.subr.mxu0 0.0
    %961 = vmatpush2.msra.mxu0 0.0
    %962 = vmatprep.subr.mxu0 0.0
    %963 = vmatpush2.msra.mxu0 0.0
    %964 = vmatprep.subr.mxu0 0.0
    %965 = vmatpush2.msra.mxu0 0.0
    %966 = vmatprep.subr.mxu0 0.0
    %967 = vmatpush2.msra.mxu0 0.0
    %968 = vmatprep.subr.mxu0 0.0
    %969 = vmatpush2.msra.mxu0 0.0
    %970 = vmatprep.subr.mxu0 0.0
    %971 = vmatpush2.msra.mxu0 0.0
    %972 = vmatprep.subr.mxu0 0.0
    %973 = vmatpush2.msra.mxu0 0.0
    %974 = vmatprep.subr.mxu0 0.0
    %975 = vmatpush2.msra.mxu0 0.0
    %976 = vmatprep.subr.mxu0 0.0
    %977 = vmatpush2.msra.mxu0 0.0
    %978 = vmatprep.subr.mxu0 0.0
    %979 = vmatpush2.msra.mxu0 0.0
    %980 = vmatprep.subr.mxu0 0.0
    %981 = vmatpush2.msra.mxu0 0.0
    %982 = vmatprep.subr.mxu0 0.0
    %983 = vmatpush2.msra.mxu0 0.0
    %984 = vmatprep.subr.mxu0 0.0
    %985 = vmatpush2.msra.mxu0 0.0
    %986 = vmatprep.subr.mxu0 0.0
    %987 = vmatpush2.msra.mxu0 0.0
    %988 = vmatprep.subr.mxu0 0.0
    %989 = vmatpush2.msra.mxu0 0.0
    %990 = vmatprep.subr.mxu0 0.0
    %991 = vmatpush2.msra.mxu0 0.0
    %992 = vmatprep.mubr.f32.mxu0 0.0
    %993 = vmatmul.mubr.f32.gmra.mxu0 %v926
    %v994 = vpop.f32.mrf.mxu0
    %v995 = vadd.f32 0.0, %v994
    %v996 = vpop.f32.mrf.mxu0
    %997 = vdwg.mxu0
    %v999 = vrot.slane %v995, 1
    %v1001 = vadd.f32 %v166, %v999
    %v1002 = vxor.u32 %v1001, 2147483648
    %v1003 = vmul.f32 %v1002, 1.442695
    %v1004 = vpow.pop %v1003
    %v1005 = vadd.f32 %v1004, 1.0
    %v1006 = vrcp.pop %v1005
    %v1007 = vmul.f32 1.0, %v1006
    %v1008 = vtanh.pop %v1001
    %v1010 = vrot.slane %v915, 7
    %v1012 = vmul.f32 %v1007, %v1010
    %1014 = vrot.lane.b32.xlu0 %v1008, 64
    %v1015 = vpop.permute.xlu0 %1014
    %v1017 = vmul.f32 %v1007, %v1015
    %1019 = vrot.lane.b32.xlu0 %v1017, 32
    %v1020 = vpop.permute.xlu0 %1019
    %v1022 = vadd.f32 %v1012, %v1020
    %v1023 = vtanh.pop %v1022
    %1025 = vrot.lane.b32.xlu0 %v1023, 64
    %v1026 = vpop.permute.xlu0 %1025
    %v1028 = vmul.f32 %v1007, %v1026
    %v1029 = vld [vmem:[#allocation8] sm:$0xff]
    %v1030 = vld [vmem:[#allocation8 + $0x8] sm:$0xff]
    %v1031 = vld [vmem:[#allocation8 + $0x10] sm:$0xff]
    %v1032 = vld [vmem:[#allocation8 + $0x18] sm:$0xff]
    %v1033 = vld [vmem:[%s7] sm:$0x1]
    %v1035 = vrot.slane %v1028, 7
    %1036 = vrot.lane.b32.xlu0 %v1035, 32
    %v1037 = vpop.permute.xlu0 %1036
    %v1038 = vsel %vm95, %v1037, 0
    %1040 = vmatprep.subr.mxu0 0.0
    %1041 = vmatpush1.msra.mxu0 0.0
    %1042 = vmatprep.subr.mxu0 0.0
    %1043 = vmatpush1.msra.mxu0 0.0
    %1044 = vmatprep.subr.mxu0 0.0
    %1045 = vmatpush1.msra.mxu0 0.0
    %1046 = vmatprep.subr.mxu0 0.0
    %1047 = vmatpush1.msra.mxu0 0.0
    %1048 = vmatprep.subr.mxu0 0.0
    %1049 = vmatpush1.msra.mxu0 0.0
    %1050 = vmatprep.subr.mxu0 0.0
    %1051 = vmatpush1.msra.mxu0 0.0
    %1052 = vmatprep.subr.mxu0 0.0
    %1053 = vmatpush1.msra.mxu0 0.0
    %1054 = vmatprep.subr.mxu0 0.0
    %1055 = vmatpush1.msra.mxu0 0.0
    %1056 = vmatprep.subr.mxu0 0.0
    %1057 = vmatpush1.msra.mxu0 0.0
    %1058 = vmatprep.subr.mxu0 0.0
    %1059 = vmatpush1.msra.mxu0 0.0
    %1060 = vmatprep.subr.mxu0 0.0
    %1061 = vmatpush1.msra.mxu0 0.0
    %1062 = vmatprep.subr.mxu0 0.0
    %1063 = vmatpush1.msra.mxu0 0.0
    %1064 = vmatprep.subr.mxu0 0.0
    %1065 = vmatpush1.msra.mxu0 %v1032
    %1066 = vmatprep.subr.mxu0 0.0
    %1067 = vmatpush1.msra.mxu0 %v1031
    %1068 = vmatprep.subr.mxu0 0.0
    %1069 = vmatpush1.msra.mxu0 %v1030
    %1070 = vmatprep.subr.mxu0 0.0
    %1071 = vmatpush1.msra.mxu0 %v1029
    %1072 = vmatprep.subr.mxu0 0.0
    %1073 = vmatpush2.msra.mxu0 0.0
    %1074 = vmatprep.subr.mxu0 0.0
    %1075 = vmatpush2.msra.mxu0 0.0
    %1076 = vmatprep.subr.mxu0 0.0
    %1077 = vmatpush2.msra.mxu0 0.0
    %1078 = vmatprep.subr.mxu0 0.0
    %1079 = vmatpush2.msra.mxu0 0.0
    %1080 = vmatprep.subr.mxu0 0.0
    %1081 = vmatpush2.msra.mxu0 0.0
    %1082 = vmatprep.subr.mxu0 0.0
    %1083 = vmatpush2.msra.mxu0 0.0
    %1084 = vmatprep.subr.mxu0 0.0
    %1085 = vmatpush2.msra.mxu0 0.0
    %1086 = vmatprep.subr.mxu0 0.0
    %1087 = vmatpush2.msra.mxu0 0.0
    %1088 = vmatprep.subr.mxu0 0.0
    %1089 = vmatpush2.msra.mxu0 0.0
    %1090 = vmatprep.subr.mxu0 0.0
    %1091 = vmatpush2.msra.mxu0 0.0
    %1092 = vmatprep.subr.mxu0 0.0
    %1093 = vmatpush2.msra.mxu0 0.0
    %1094 = vmatprep.subr.mxu0 0.0
    %1095 = vmatpush2.msra.mxu0 0.0
    %1096 = vmatprep.subr.mxu0 0.0
    %1097 = vmatpush2.msra.mxu0 0.0
    %1098 = vmatprep.subr.mxu0 0.0
    %1099 = vmatpush2.msra.mxu0 0.0
    %1100 = vmatprep.subr.mxu0 0.0
    %1101 = vmatpush2.msra.mxu0 0.0
    %1102 = vmatprep.subr.mxu0 0.0
    %1103 = vmatpush2.msra.mxu0 0.0
    %1104 = vmatprep.mubr.f32.mxu0 0.0
    %1105 = vmatmul.mubr.f32.gmra.mxu0 %v1038
    %v1106 = vpop.f32.mrf.mxu0
    %v1107 = vadd.f32 %v1033, %v1106
    %v1108 = vpop.f32.mrf.mxu0
    %1109 = vdwg.mxu0
    %1110 = vst [vmem:[#allocation10] sm:$0x1] %v1107
    // Predicated region
    $region50: #{tpu_custom_call.1} parent=1 // pred_check
      _
    $region51: #{tpu_custom_call.1} parent=1 // pred_check_branch
      %1112 = sbr.rel (0) target = $region53
    $region52: #{tpu_custom_call.1} parent=1 // pred_region
      %s1114 = ssub.s32 16, 16
      %1115 = vsyncadd [#allocation4], %s1114
      %s1117 = sshll.u32 [#allocation10], 4
      %s1118 = int_to_ptr.vmem [resolvable:$true] %s1117
      %1120 = dma.vmem_to_hbm [thread:$0]  %s1118, 16, %s8, [#allocation4]
    $region53: #{tpu_custom_call.1} parent=1 // pred_fallthru
      _
    // Predicated region
    $region54: #{tpu_custom_call.1} parent=1 // pred_check
      _
    $region55: #{tpu_custom_call.1} parent=1 // pred_check_branch
      %1122 = sbr.rel (0) target = $region57
    $region56: #{tpu_custom_call.1} parent=1 // pred_region
      %1123 = dma.done [#allocation4], 16
    $region57: #{tpu_custom_call.1} parent=1 // pred_fallthru
      _
    %1124 = vsyncpa [#allocation3], 1
    %1125 = vsyncpa [#allocation6], 1
    %1126 = vsyncpa [#allocation9], 1
    %1127 = vsyncpa [#allocation4], 1

</llo_original>
